<compile_context>
chip_gen: v6e
topology: v6e:2x2x1
jax: 0.10.0
libtpu: 0.0.40
codegen_flags: <defaults>
</compile_context>

<pallas_src>
import math

import jax
import jax.numpy as jnp
from jax.experimental import pallas as pl
from jax.experimental.pallas import tpu as pltpu


def _poniter_kernel(g_ref, s_ref, d_ref, w1g_ref, w2s_ref, wd_ref, w2c_ref,
                    vv1_ref, vv2_ref, ind_ref, indT_ref, out_ref):
    """Processes TB batch elements folded into the lane dim (TN = TB*S)."""
    H = w2c_ref.shape[0]

    g = g_ref[...]                       # (H, TN)  global slab
    s = s_ref[...]                       # (H, TN)  static slab
    d = d_ref[...]                       # (H, TN)  dynamic slab

    # --- pre-activations: 3 dots, zero wasted MACs -------------------------
    pre_d = jnp.dot(wd_ref[...], d, preferred_element_type=jnp.float32)    # (2H, TN)
    pre1 = jnp.dot(w1g_ref[...], g, preferred_element_type=jnp.float32) + pre_d[:H, :]
    pre2 = jnp.dot(w2s_ref[...], s, preferred_element_type=jnp.float32) + pre_d[H:, :]

    h1 = jnp.tanh(pre1)                                                     # (H, TN)
    a1 = jnp.dot(vv1_ref[...], h1, preferred_element_type=jnp.float32)      # (1, TN)

    # --- per-batch softmax over S, with exp on the single (1, TN) row -------
    ind = ind_ref[...]                   # (TB, TN) block-diagonal indicator (f32)
    ind_t = indT_ref[...]                # (TN, TB)

    m = jnp.max(a1, axis=1, keepdims=True)                                  # (1, 1)
    e1 = jnp.exp(a1 - m)                                                    # (1, TN)
    denom = jnp.dot(e1, ind_t, preferred_element_type=jnp.float32)          # (1, TB)
    inv = pl.reciprocal(denom, approx=True)                                 # (1, TB)
    inv_b = jnp.dot(inv, ind, preferred_element_type=jnp.float32)           # (1, TN)
    p1 = e1 * inv_b                                                         # (1, TN)

    # --- context[b] = static[b] @ softmax[b] via one indicator matmul -------
    ctx = jnp.dot(s * p1, ind_t, preferred_element_type=jnp.float32)        # (H, TB)
    ctx_term = jnp.dot(w2c_ref[...], ctx, preferred_element_type=jnp.float32)  # (H, TB)
    ctx_exp = jnp.dot(ctx_term, ind, preferred_element_type=jnp.float32)    # (H, TN)

    h2 = jnp.tanh(pre2 + ctx_exp)                                           # (H, TN)
    out_ref[...] = jnp.dot(vv2_ref[...], h2,
                           preferred_element_type=jnp.float32)              # (1, TN)


def _choose_batch_tile(B, S, H):
    """Return (TB, Bp): batches per grid step and (possibly padded) batch count.

    Preference order:
      1. TB divides B, TB*S % 128 == 0, TN within the VMEM-aware lane cap,
         >= 2 grid steps (keeps both v7x TensorCores busy).
      2. Single full tile (block == full array, no 128-alignment needed).
      3. Pad B up to a multiple of an aligned TB (rare fallback: costs one
         extra HBM pass over the inputs).
    """
    total = B * S
    # VMEM-aware lane cap: working set ~ (3 inputs double-buffered + temps)
    # ~ 14 f32 rows of height H per lane, kept well under default scoped VMEM.
    lane_cap = int(min(2048, max(256, (20 * (1 << 20)) // (64 * max(H, 1)))))
    tb_unit = 128 // math.gcd(S, 128)          # smallest TB with TB*S % 128 == 0
    max_tb = max(tb_unit, ((lane_cap // max(S, 1)) // tb_unit) * tb_unit)

    if total > 256:
        cand = min(max_tb, (B // 2 // tb_unit) * tb_unit)   # leave >= 2 grid steps
        while cand >= tb_unit:
            if B % cand == 0:
                return cand, B                               # no padding needed
            cand -= tb_unit

    if total <= max(256, lane_cap):
        return B, B                                          # one small full tile

    # Fallback: pad whole zero batches (independent, dropped by the wrapper).
    TB = max_tb
    Bp = ((B + TB - 1) // TB) * TB
    return TB, Bp


def poniter_forward(global_, static_hidden, dynamic_hidden, vv1, ww1, vv2, ww2):
    B, H, S = static_hidden.shape
    f32 = jnp.float32

    vv1_2d = vv1.reshape(1, H).astype(f32)
    vv2_2d = vv2.reshape(1, H).astype(f32)
    ww1_2d = ww1.reshape(H, 2 * H).astype(f32)
    ww2_2d = ww2.reshape(H, 3 * H).astype(f32)

    w1g = ww1_2d[:, :H]                       # acts on global_
    w2s = ww2_2d[:, :H]                       # acts on static
    # Both branches contract the same dynamic slab -> stack into one (2H, H)
    # weight so the dynamic input goes through the MXU exactly once.
    w_d = jnp.concatenate([ww1_2d[:, H:2 * H], ww2_2d[:, H:2 * H]], axis=0)
    w2c = ww2_2d[:, 2 * H:]                   # context block of ww2

    TB, Bp = _choose_batch_tile(B, S, H)
    TN = TB * S
    n_tiles = Bp // TB

    # Lane-major slabs (H, B*S): one relayout pass per input (no concat pass,
    # no stacked-slab build).  Padding only on the rare fallback path.
    def to_slab(x):
        x = jnp.transpose(x.astype(f32), (1, 0, 2)).reshape(H, B * S)
        if Bp != B:
            # TODO(synk): a ragged-last-tile mask would avoid this extra HBM pass.
            x = jnp.pad(x, ((0, 0), (0, (Bp - B) * S)))
        return x

    g2 = to_slab(global_)
    s2 = to_slab(static_hidden)
    d2 = to_slab(dynamic_hidden)

    # Block-diagonal segment indicator (lane -> local batch), built once in the
    # wrapper; constant-index blocks are DMA'd once and stay resident in VMEM.
    seg = jnp.arange(TN, dtype=jnp.int32) // S
    ind = (seg[None, :] == jnp.arange(TB, dtype=jnp.int32)[:, None]).astype(f32)  # (TB,TN)
    ind_t = ind.T                                                                  # (TN,TB)

    out_flat = pl.pallas_call(
        _poniter_kernel,
        out_shape=jax.ShapeDtypeStruct((1, Bp * S), f32),
        grid_spec=pltpu.PrefetchScalarGridSpec(
            num_scalar_prefetch=0,
            grid=(n_tiles,),
            in_specs=[
                pl.BlockSpec((H, TN), lambda i: (0, i)),       # global slab
                pl.BlockSpec((H, TN), lambda i: (0, i)),       # static slab
                pl.BlockSpec((H, TN), lambda i: (0, i)),       # dynamic slab
                pl.BlockSpec((H, H), lambda i: (0, 0)),        # ww1[:, :H]
                pl.BlockSpec((H, H), lambda i: (0, 0)),        # ww2[:, :H]
                pl.BlockSpec((2 * H, H), lambda i: (0, 0)),    # stacked dyn weights
                pl.BlockSpec((H, H), lambda i: (0, 0)),        # ww2[:, 2H:]
                pl.BlockSpec((1, H), lambda i: (0, 0)),        # vv1
                pl.BlockSpec((1, H), lambda i: (0, 0)),        # vv2
                pl.BlockSpec((TB, TN), lambda i: (0, 0)),      # indicator
                pl.BlockSpec((TN, TB), lambda i: (0, 0)),      # indicator^T
            ],
            out_specs=pl.BlockSpec((1, TN), lambda i: (0, i)),  # lane-dense output
        ),
        compiler_params=pltpu.CompilerParams(
            dimension_semantics=("parallel",)),
    )(g2, s2, d2, w1g, w2s, w_d, w2c, vv1_2d, vv2_2d, ind, ind_t)

    return out_flat.reshape(Bp, S)[:B]


def poniter_reference(global_, static_hidden, dynamic_hidden, vv1, ww1, vv2, ww2):
    """Pure-JAX reference mirroring the PyTorch forward."""
    B, H, S = static_hidden.shape
    cat_1 = jnp.concatenate([global_, dynamic_hidden], axis=1)          # (B,2H,S)
    attn_1 = jnp.einsum('oh,bhs->bos', vv1[0],
                        jnp.tanh(jnp.einsum('hk,bks->bhs', ww1[0], cat_1)))
    attns_1 = jax.nn.softmax(attn_1, axis=2)                            # (B,1,S)
    context = jnp.einsum('bos,bsh->boh', attns_1,
                         jnp.transpose(static_hidden, (0, 2, 1)))       # (B,1,H)
    context = jnp.broadcast_to(jnp.transpose(context, (0, 2, 1)), (B, H, S))
    cat_3 = jnp.concatenate([static_hidden, dynamic_hidden, context], axis=1)
    so = jnp.einsum('oh,bhs->bos', vv2[0],
                    jnp.tanh(jnp.einsum('hk,bks->bhs', ww2[0], cat_3)))
    return so[:, 0, :]                                                  # (B,S)


if __name__ == "__main__":
    B, H, S = 2, 32, 16
    key = jax.random.PRNGKey(0)
    k = jax.random.split(key, 7)

    global_ = jax.random.normal(k[0], (B, H, S), jnp.float32)
    static_hidden = jax.random.normal(k[1], (B, H, S), jnp.float32)
    dynamic_hidden = jax.random.normal(k[2], (B, H, S), jnp.float32)

    # Deterministic parameter init (module shapes from __init__).
    vv1 = jax.random.normal(k[3], (1, 1, H), jnp.float32) * 0.1
    ww1 = jax.random.normal(k[4], (1, H, 2 * H), jnp.float32) * 0.1
    vv2 = jax.random.normal(k[5], (1, 1, H), jnp.float32) * 0.1
    ww2 = jax.random.normal(k[6], (1, H, 3 * H), jnp.float32) * 0.1

    out = poniter_forward(global_, static_hidden, dynamic_hidden,
                          vv1, ww1, vv2, ww2)
    out = jax.block_until_ready(out)

    ref = poniter_reference(global_, static_hidden, dynamic_hidden,
                            vv1, ww1, vv2, ww2)
    assert out.shape == (B, S)
    # Tolerance 1e-3: softmax denominator uses the EUP approximate reciprocal
    # (pl.reciprocal(approx=True)); everything else accumulates in f32.
    assert jnp.allclose(out, ref, atol=1e-3, rtol=1e-3), "mismatch vs reference"

    print("KERNEL_OK")
</pallas_src>

<mosaic_0001>
module attributes {stable_mosaic.version = 11 : i64} {
  func.func @_poniter_kernel(%arg0: i32, %arg1: memref<32x32xf32, #tpu.memory_space<vmem>>, %arg2: memref<32x32xf32, #tpu.memory_space<vmem>>, %arg3: memref<32x32xf32, #tpu.memory_space<vmem>>, %arg4: memref<32x32xf32, #tpu.memory_space<vmem>>, %arg5: memref<32x32xf32, #tpu.memory_space<vmem>>, %arg6: memref<64x32xf32, #tpu.memory_space<vmem>>, %arg7: memref<32x32xf32, #tpu.memory_space<vmem>>, %arg8: memref<1x32xf32, #tpu.memory_space<vmem>>, %arg9: memref<1x32xf32, #tpu.memory_space<vmem>>, %arg10: memref<2x32xf32, #tpu.memory_space<vmem>>, %arg11: memref<32x2xf32, #tpu.memory_space<vmem>>, %arg12: memref<1x32xf32, #tpu.memory_space<vmem>>) attributes {dimension_semantics = [#tpu.dimension_semantics<parallel>], iteration_bounds = array<i64: 1>, scalar_prefetch = 0 : i64, scratch_operands = 0 : i64, tpu.core_type = #tpu.core_type<tc>, window_params = [{transform_indices = @transform_0, window_bounds = array<i64: 32, 32>}, {transform_indices = @transform_1, window_bounds = array<i64: 32, 32>}, {transform_indices = @transform_2, window_bounds = array<i64: 32, 32>}, {pipeline_mode = #tpu.pipeline_mode<synchronous>, transform_indices = @transform_3, window_bounds = array<i64: 32, 32>}, {pipeline_mode = #tpu.pipeline_mode<synchronous>, transform_indices = @transform_4, window_bounds = array<i64: 32, 32>}, {pipeline_mode = #tpu.pipeline_mode<synchronous>, transform_indices = @transform_5, window_bounds = array<i64: 64, 32>}, {pipeline_mode = #tpu.pipeline_mode<synchronous>, transform_indices = @transform_6, window_bounds = array<i64: 32, 32>}, {pipeline_mode = #tpu.pipeline_mode<synchronous>, transform_indices = @transform_7, window_bounds = array<i64: 1, 32>}, {pipeline_mode = #tpu.pipeline_mode<synchronous>, transform_indices = @transform_8, window_bounds = array<i64: 1, 32>}, {pipeline_mode = #tpu.pipeline_mode<synchronous>, transform_indices = @transform_9, window_bounds = array<i64: 2, 32>}, {pipeline_mode = #tpu.pipeline_mode<synchronous>, transform_indices = @transform_10, window_bounds = array<i64: 32, 2>}, {transform_indices = @transform_11, window_bounds = array<i64: 1, 32>}]} {
    %c0 = arith.constant 0 : index
    %c0_0 = arith.constant 0 : index
    %0 = vector.load %arg1[%c0, %c0_0] : memref<32x32xf32, #tpu.memory_space<vmem>>, vector<32x32xf32>
    %c0_1 = arith.constant 0 : index
    %c0_2 = arith.constant 0 : index
    %1 = vector.load %arg2[%c0_1, %c0_2] : memref<32x32xf32, #tpu.memory_space<vmem>>, vector<32x32xf32>
    %c0_3 = arith.constant 0 : index
    %c0_4 = arith.constant 0 : index
    %2 = vector.load %arg3[%c0_3, %c0_4] : memref<32x32xf32, #tpu.memory_space<vmem>>, vector<32x32xf32>
    %c0_5 = arith.constant 0 : index
    %c0_6 = arith.constant 0 : index
    %3 = vector.load %arg6[%c0_5, %c0_6] : memref<64x32xf32, #tpu.memory_space<vmem>>, vector<64x32xf32>
    %cst = arith.constant dense<0.000000e+00> : vector<64x32xf32>
    %4 = tpu.matmul %3, %2, %cst {dimension_numbers = #tpu.dot_dimension_numbers<[1], [0], [0], [1], [0, 0, 1, 1], [], []>} : vector<64x32xf32>, vector<32x32xf32>, vector<64x32xf32> -> vector<64x32xf32>
    %c0_7 = arith.constant 0 : index
    %c0_8 = arith.constant 0 : index
    %5 = vector.load %arg4[%c0_7, %c0_8] : memref<32x32xf32, #tpu.memory_space<vmem>>, vector<32x32xf32>
    %cst_9 = arith.constant dense<0.000000e+00> : vector<32x32xf32>
    %6 = tpu.matmul %5, %0, %cst_9 {dimension_numbers = #tpu.dot_dimension_numbers<[1], [0], [0], [1], [0, 0, 1, 1], [], []>} : vector<32x32xf32>, vector<32x32xf32>, vector<32x32xf32> -> vector<32x32xf32>
    %7 = vector.extract_strided_slice %4 {offsets = [0, 0], sizes = [32, 32], strides = [1, 1]} : vector<64x32xf32> to vector<32x32xf32>
    %8 = arith.addf %6, %7 : vector<32x32xf32>
    %c0_10 = arith.constant 0 : index
    %c0_11 = arith.constant 0 : index
    %9 = vector.load %arg5[%c0_10, %c0_11] : memref<32x32xf32, #tpu.memory_space<vmem>>, vector<32x32xf32>
    %cst_12 = arith.constant dense<0.000000e+00> : vector<32x32xf32>
    %10 = tpu.matmul %9, %1, %cst_12 {dimension_numbers = #tpu.dot_dimension_numbers<[1], [0], [0], [1], [0, 0, 1, 1], [], []>} : vector<32x32xf32>, vector<32x32xf32>, vector<32x32xf32> -> vector<32x32xf32>
    %11 = vector.extract_strided_slice %4 {offsets = [32, 0], sizes = [32, 32], strides = [1, 1]} : vector<64x32xf32> to vector<32x32xf32>
    %12 = arith.addf %10, %11 : vector<32x32xf32>
    %13 = math.tanh %8 : vector<32x32xf32>
    %c0_13 = arith.constant 0 : index
    %c0_14 = arith.constant 0 : index
    %14 = vector.load %arg8[%c0_13, %c0_14] : memref<1x32xf32, #tpu.memory_space<vmem>>, vector<1x32xf32>
    %cst_15 = arith.constant dense<0.000000e+00> : vector<1x32xf32>
    %15 = tpu.matmul %14, %13, %cst_15 {dimension_numbers = #tpu.dot_dimension_numbers<[1], [0], [0], [1], [0, 0, 1, 1], [], []>} : vector<1x32xf32>, vector<32x32xf32>, vector<1x32xf32> -> vector<1x32xf32>
    %c0_16 = arith.constant 0 : index
    %c0_17 = arith.constant 0 : index
    %16 = vector.load %arg10[%c0_16, %c0_17] : memref<2x32xf32, #tpu.memory_space<vmem>>, vector<2x32xf32>
    %c0_18 = arith.constant 0 : index
    %c0_19 = arith.constant 0 : index
    %17 = vector.load %arg11[%c0_18, %c0_19] : memref<32x2xf32, #tpu.memory_space<vmem>>, vector<32x2xf32>
    %cst_20 = arith.constant dense<0xFF800000> : vector<1xf32>
    %18 = vector.multi_reduction <maximumf>, %15, %cst_20 [1] : vector<1x32xf32> to vector<1xf32>
    %19 = vector.shape_cast %18 : vector<1xf32> to vector<1x1xf32>
    %20 = vector.broadcast %19 : vector<1x1xf32> to vector<1x32xf32>
    %21 = arith.subf %15, %20 : vector<1x32xf32>
    %22 = math.exp %21 : vector<1x32xf32>
    %cst_21 = arith.constant dense<0.000000e+00> : vector<1x2xf32>
    %23 = tpu.matmul %22, %17, %cst_21 {dimension_numbers = #tpu.dot_dimension_numbers<[1], [0], [0], [1], [0, 0, 1, 1], [], []>} : vector<1x32xf32>, vector<32x2xf32>, vector<1x2xf32> -> vector<1x2xf32>
    %24 = tpu.reciprocal %23 {approx = true} : vector<1x2xf32> -> vector<1x2xf32>
    %cst_22 = arith.constant dense<0.000000e+00> : vector<1x32xf32>
    %25 = tpu.matmul %24, %16, %cst_22 {dimension_numbers = #tpu.dot_dimension_numbers<[1], [0], [0], [1], [0, 0, 1, 1], [], []>} : vector<1x2xf32>, vector<2x32xf32>, vector<1x32xf32> -> vector<1x32xf32>
    %26 = arith.mulf %22, %25 : vector<1x32xf32>
    %27 = vector.broadcast %26 : vector<1x32xf32> to vector<32x32xf32>
    %28 = arith.mulf %1, %27 : vector<32x32xf32>
    %cst_23 = arith.constant dense<0.000000e+00> : vector<32x2xf32>
    %29 = tpu.matmul %28, %17, %cst_23 {dimension_numbers = #tpu.dot_dimension_numbers<[1], [0], [0], [1], [0, 0, 1, 1], [], []>} : vector<32x32xf32>, vector<32x2xf32>, vector<32x2xf32> -> vector<32x2xf32>
    %c0_24 = arith.constant 0 : index
    %c0_25 = arith.constant 0 : index
    %30 = vector.load %arg7[%c0_24, %c0_25] : memref<32x32xf32, #tpu.memory_space<vmem>>, vector<32x32xf32>
    %cst_26 = arith.constant dense<0.000000e+00> : vector<32x2xf32>
    %31 = tpu.matmul %30, %29, %cst_26 {dimension_numbers = #tpu.dot_dimension_numbers<[1], [0], [0], [1], [0, 0, 1, 1], [], []>} : vector<32x32xf32>, vector<32x2xf32>, vector<32x2xf32> -> vector<32x2xf32>
    %cst_27 = arith.constant dense<0.000000e+00> : vector<32x32xf32>
    %32 = tpu.matmul %31, %16, %cst_27 {dimension_numbers = #tpu.dot_dimension_numbers<[1], [0], [0], [1], [0, 0, 1, 1], [], []>} : vector<32x2xf32>, vector<2x32xf32>, vector<32x32xf32> -> vector<32x32xf32>
    %33 = arith.addf %12, %32 : vector<32x32xf32>
    %34 = math.tanh %33 : vector<32x32xf32>
    %c0_28 = arith.constant 0 : index
    %c0_29 = arith.constant 0 : index
    %35 = vector.load %arg9[%c0_28, %c0_29] : memref<1x32xf32, #tpu.memory_space<vmem>>, vector<1x32xf32>
    %cst_30 = arith.constant dense<0.000000e+00> : vector<1x32xf32>
    %36 = tpu.matmul %35, %34, %cst_30 {dimension_numbers = #tpu.dot_dimension_numbers<[1], [0], [0], [1], [0, 0, 1, 1], [], []>} : vector<1x32xf32>, vector<32x32xf32>, vector<1x32xf32> -> vector<1x32xf32>
    %c0_31 = arith.constant 0 : index
    %c0_32 = arith.constant 0 : index
    %37 = vector.load %arg12[%c0_31, %c0_32] : memref<1x32xf32, #tpu.memory_space<vmem>>, vector<1x32xf32>
    tpu.vector_store %arg12[%c0_31, %c0_32], %36 {strides = array<i32>} : memref<1x32xf32, #tpu.memory_space<vmem>>, vector<1x32xf32>,
    return
  }
  func.func @transform_0(%arg0: i32) -> (i32, i32) {
    %c0_i32 = arith.constant 0 : i32
    %c0_i32_0 = arith.constant 0 : i32
    return %c0_i32, %arg0 : i32, i32
  }
  func.func @transform_1(%arg0: i32) -> (i32, i32) {
    %c0_i32 = arith.constant 0 : i32
    %c0_i32_0 = arith.constant 0 : i32
    return %c0_i32, %arg0 : i32, i32
  }
  func.func @transform_2(%arg0: i32) -> (i32, i32) {
    %c0_i32 = arith.constant 0 : i32
    %c0_i32_0 = arith.constant 0 : i32
    return %c0_i32, %arg0 : i32, i32
  }
  func.func @transform_3(%arg0: i32) -> (i32, i32) {
    %c0_i32 = arith.constant 0 : i32
    %c0_i32_0 = arith.constant 0 : i32
    %c0_i32_1 = arith.constant 0 : i32
    return %c0_i32, %c0_i32_0 : i32, i32
  }
  func.func @transform_4(%arg0: i32) -> (i32, i32) {
    %c0_i32 = arith.constant 0 : i32
    %c0_i32_0 = arith.constant 0 : i32
    %c0_i32_1 = arith.constant 0 : i32
    return %c0_i32, %c0_i32_0 : i32, i32
  }
  func.func @transform_5(%arg0: i32) -> (i32, i32) {
    %c0_i32 = arith.constant 0 : i32
    %c0_i32_0 = arith.constant 0 : i32
    %c0_i32_1 = arith.constant 0 : i32
    return %c0_i32, %c0_i32_0 : i32, i32
  }
  func.func @transform_6(%arg0: i32) -> (i32, i32) {
    %c0_i32 = arith.constant 0 : i32
    %c0_i32_0 = arith.constant 0 : i32
    %c0_i32_1 = arith.constant 0 : i32
    return %c0_i32, %c0_i32_0 : i32, i32
  }
  func.func @transform_7(%arg0: i32) -> (i32, i32) {
    %c0_i32 = arith.constant 0 : i32
    %c0_i32_0 = arith.constant 0 : i32
    %c0_i32_1 = arith.constant 0 : i32
    return %c0_i32, %c0_i32_0 : i32, i32
  }
  func.func @transform_8(%arg0: i32) -> (i32, i32) {
    %c0_i32 = arith.constant 0 : i32
    %c0_i32_0 = arith.constant 0 : i32
    %c0_i32_1 = arith.constant 0 : i32
    return %c0_i32, %c0_i32_0 : i32, i32
  }
  func.func @transform_9(%arg0: i32) -> (i32, i32) {
    %c0_i32 = arith.constant 0 : i32
    %c0_i32_0 = arith.constant 0 : i32
    %c0_i32_1 = arith.constant 0 : i32
    return %c0_i32, %c0_i32_0 : i32, i32
  }
  func.func @transform_10(%arg0: i32) -> (i32, i32) {
    %c0_i32 = arith.constant 0 : i32
    %c0_i32_0 = arith.constant 0 : i32
    %c0_i32_1 = arith.constant 0 : i32
    return %c0_i32, %c0_i32_0 : i32, i32
  }
  func.func @transform_11(%arg0: i32) -> (i32, i32) {
    %c0_i32 = arith.constant 0 : i32
    %c0_i32_0 = arith.constant 0 : i32
    return %c0_i32, %arg0 : i32, i32
  }
}

</mosaic_0001>

<llo_original>
// kernel: tpu_custom_call.1
$region0: #{tpu_custom_call.1}
  #allocation0 [shape = 'u32[]', space=smem, size = 0x4, offset = 0x4, fixed_abs, tag = 'smem constant byte address 0x4 - core index']
  #allocation1 [shape = 'u32[144,128]{1,0:T(1,128)}', space=vmem, size = 0x12000, scoped, tag = 'internal scratch']
  %s0 = inlined_call_operand.vmem [shape: f32[32,32], index: 0, kind: input, shape index: {}]
  %s1 = inlined_call_operand.vmem [shape: f32[32,32], index: 1, kind: input, shape index: {}]
  %s2 = inlined_call_operand.vmem [shape: f32[32,32], index: 2, kind: input, shape index: {}]
  %s3 = inlined_call_operand.hbm [shape: f32[32,32], index: 3, kind: input, shape index: {}]
  %s4 = inlined_call_operand.hbm [shape: f32[32,32], index: 4, kind: input, shape index: {}]
  %s5 = inlined_call_operand.vmem [shape: f32[64,32], index: 5, kind: input, shape index: {}]
  %s6 = inlined_call_operand.hbm [shape: f32[32,32], index: 6, kind: input, shape index: {}]
  %s7 = inlined_call_operand.vmem [shape: f32[1,32], index: 7, kind: input, shape index: {}]
  %s8 = inlined_call_operand.vmem [shape: f32[1,32], index: 8, kind: input, shape index: {}]
  %s9 = inlined_call_operand.vmem [shape: f32[2,32], index: 9, kind: input, shape index: {}]
  %s10 = inlined_call_operand.vmem [shape: f32[32,2], index: 10, kind: input, shape index: {}]
  %s11 = inlined_call_operand.hbm [shape: f32[1,32], index: 11, kind: output, shape index: {}]
  %s12 = sld [smem:[#allocation0]]
  $region66: #{tpu_custom_call.1} parent=0
    _
  %s14 = ssub.s32 1, %s12
  %s15 = scalar_select 0, %s14, %s12
  $region1: #{tpu_custom_call.1} parent=0
    #allocation2 [shape = 'u8[16384]{0}', space=vmem, size = 0x4000, scoped, tag = 'input window, operand 3, single buffered']
    #allocation3 [shape = 's32[1]{0}', space=sflag, size = 0x4, scoped, tag = 'scoped memory for tpu_custom_call.1']
    #allocation4 [shape = 's32[1]{0}', space=sflag, size = 0x4, scoped, tag = 'scoped memory for tpu_custom_call.1']
    #allocation5 [shape = 'u8[16384]{0}', space=vmem, size = 0x4000, scoped, tag = 'input window, operand 4, single buffered']
    #allocation6 [shape = 's32[1]{0}', space=sflag, size = 0x4, scoped, tag = 'scoped memory for tpu_custom_call.1']
    #allocation7 [shape = 'u8[16384]{0}', space=vmem, size = 0x4000, scoped, tag = 'input window, operand 6, single buffered']
    #allocation8 [shape = 'u8[512]{0}', space=vmem, size = 0x400, scoped, tag = 'output window, operand 0, single buffered']
    %16 = vsyncpa [#allocation3], 0
    %17 = vsyncpa [#allocation6], 0
    %18 = vsyncpa [#allocation4], 0
    // Predicated region
    $region2: #{tpu_custom_call.1} parent=1 // pred_check
      _
    $region3: #{tpu_custom_call.1} parent=1 // pred_check_branch
      %20 = sbr.rel (0) target = $region5
    $region4: #{tpu_custom_call.1} parent=1 // pred_region
      _
    $region5: #{tpu_custom_call.1} parent=1 // pred_fallthru
      _
    // Predicated region
    $region6: #{tpu_custom_call.1} parent=1 // pred_check
      _
    $region7: #{tpu_custom_call.1} parent=1 // pred_check_branch
      %22 = sbr.rel (0) target = $region9
    $region8: #{tpu_custom_call.1} parent=1 // pred_region
      _
    $region9: #{tpu_custom_call.1} parent=1 // pred_fallthru
      _
    // Predicated region
    $region10: #{tpu_custom_call.1} parent=1 // pred_check
      _
    $region11: #{tpu_custom_call.1} parent=1 // pred_check_branch
      %24 = sbr.rel (0) target = $region13
    $region12: #{tpu_custom_call.1} parent=1 // pred_region
      _
    $region13: #{tpu_custom_call.1} parent=1 // pred_fallthru
      _
    // Predicated region
    $region14: #{tpu_custom_call.1} parent=1 // pred_check
      _
    $region15: #{tpu_custom_call.1} parent=1 // pred_check_branch
      %26 = sbr.rel (0) target = $region17
    $region16: #{tpu_custom_call.1} parent=1 // pred_region
      %s28 = ssub.s32 512, 512
      %29 = vsyncadd [#allocation3], %s28
      %s30 = sshll.u32 [#allocation2], 4
      %s31 = int_to_ptr.vmem [resolvable:$true] %s30
      %36 = dma.hbm_to_vmem [thread:$0]  %s3, 512, %s31, [#allocation3], 128, 128, 8
    $region17: #{tpu_custom_call.1} parent=1 // pred_fallthru
      _
    // Predicated region
    $region18: #{tpu_custom_call.1} parent=1 // pred_check
      _
    $region19: #{tpu_custom_call.1} parent=1 // pred_check_branch
      %38 = sbr.rel (0) target = $region21
    $region20: #{tpu_custom_call.1} parent=1 // pred_region
      %s40 = ssub.s32 512, 512
      %41 = vsyncadd [#allocation6], %s40
      %s42 = sshll.u32 [#allocation5], 4
      %s43 = int_to_ptr.vmem [resolvable:$true] %s42
      %48 = dma.hbm_to_vmem [thread:$0]  %s4, 512, %s43, [#allocation6], 128, 128, 8
    $region21: #{tpu_custom_call.1} parent=1 // pred_fallthru
      _
    // Predicated region
    $region22: #{tpu_custom_call.1} parent=1 // pred_check
      _
    $region23: #{tpu_custom_call.1} parent=1 // pred_check_branch
      %50 = sbr.rel (0) target = $region25
    $region24: #{tpu_custom_call.1} parent=1 // pred_region
      _
    $region25: #{tpu_custom_call.1} parent=1 // pred_fallthru
      _
    // Predicated region
    $region26: #{tpu_custom_call.1} parent=1 // pred_check
      _
    $region27: #{tpu_custom_call.1} parent=1 // pred_check_branch
      %52 = sbr.rel (0) target = $region29
    $region28: #{tpu_custom_call.1} parent=1 // pred_region
      %s54 = ssub.s32 512, 512
      %55 = vsyncadd [#allocation6], %s54
      %s56 = sshll.u32 [#allocation7], 4
      %s57 = int_to_ptr.vmem [resolvable:$true] %s56
      %62 = dma.hbm_to_vmem [thread:$0]  %s6, 512, %s57, [#allocation6], 128, 128, 8
    $region29: #{tpu_custom_call.1} parent=1 // pred_fallthru
      _
    // Predicated region
    $region30: #{tpu_custom_call.1} parent=1 // pred_check
      _
    $region31: #{tpu_custom_call.1} parent=1 // pred_check_branch
      %64 = sbr.rel (0) target = $region33
    $region32: #{tpu_custom_call.1} parent=1 // pred_region
      _
    $region33: #{tpu_custom_call.1} parent=1 // pred_fallthru
      _
    // Predicated region
    $region34: #{tpu_custom_call.1} parent=1 // pred_check
      _
    $region35: #{tpu_custom_call.1} parent=1 // pred_check_branch
      %66 = sbr.rel (0) target = $region37
    $region36: #{tpu_custom_call.1} parent=1 // pred_region
      _
    $region37: #{tpu_custom_call.1} parent=1 // pred_fallthru
      _
    // Predicated region
    $region38: #{tpu_custom_call.1} parent=1 // pred_check
      _
    $region39: #{tpu_custom_call.1} parent=1 // pred_check_branch
      %68 = sbr.rel (0) target = $region41
    $region40: #{tpu_custom_call.1} parent=1 // pred_region
      _
    $region41: #{tpu_custom_call.1} parent=1 // pred_fallthru
      _
    // Predicated region
    $region42: #{tpu_custom_call.1} parent=1 // pred_check
      _
    $region43: #{tpu_custom_call.1} parent=1 // pred_check_branch
      %70 = sbr.rel (0) target = $region45
    $region44: #{tpu_custom_call.1} parent=1 // pred_region
      _
    $region45: #{tpu_custom_call.1} parent=1 // pred_fallthru
      _
    // Predicated region
    $region46: #{tpu_custom_call.1} parent=1 // pred_check
      _
    $region47: #{tpu_custom_call.1} parent=1 // pred_check_branch
      %72 = sbr.rel (0) target = $region49
    $region48: #{tpu_custom_call.1} parent=1 // pred_region
      %73 = dma.done [#allocation3], 512
    $region49: #{tpu_custom_call.1} parent=1 // pred_fallthru
      _
    // Predicated region
    $region50: #{tpu_custom_call.1} parent=1 // pred_check
      _
    $region51: #{tpu_custom_call.1} parent=1 // pred_check_branch
      %75 = sbr.rel (0) target = $region53
    $region52: #{tpu_custom_call.1} parent=1 // pred_region
      %76 = dma.done [#allocation6], 512
    $region53: #{tpu_custom_call.1} parent=1 // pred_fallthru
      _
    // Predicated region
    $region54: #{tpu_custom_call.1} parent=1 // pred_check
      _
    $region55: #{tpu_custom_call.1} parent=1 // pred_check_branch
      %78 = sbr.rel (0) target = $region57
    $region56: #{tpu_custom_call.1} parent=1 // pred_region
      %79 = dma.done [#allocation6], 512
    $region57: #{tpu_custom_call.1} parent=1 // pred_fallthru
      _
    %v80 = vld [vmem:[%s0] sm:$0xff]
    %v81 = vld [vmem:[%s0 + $0x8] sm:$0xff]
    %v82 = vld [vmem:[%s0 + $0x10] sm:$0xff]
    %v83 = vld [vmem:[%s0 + $0x18] sm:$0xff]
    %v84 = vld [vmem:[%s1] sm:$0xff]
    %v85 = vld [vmem:[%s1 + $0x8] sm:$0xff]
    %v86 = vld [vmem:[%s1 + $0x10] sm:$0xff]
    %v87 = vld [vmem:[%s1 + $0x18] sm:$0xff]
    %v88 = vld [vmem:[%s2] sm:$0xff]
    %v89 = vld [vmem:[%s2 + $0x8] sm:$0xff]
    %v90 = vld [vmem:[%s2 + $0x10] sm:$0xff]
    %v91 = vld [vmem:[%s2 + $0x18] sm:$0xff]
    %v92 = vld [vmem:[%s5] sm:$0xff]
    %v93 = vld [vmem:[%s5 + $0x8] sm:$0xff]
    %v94 = vld [vmem:[%s5 + $0x10] sm:$0xff]
    %v95 = vld [vmem:[%s5 + $0x18] sm:$0xff]
    %v96 = vld [vmem:[%s5 + $0x20] sm:$0xff]
    %v97 = vld [vmem:[%s5 + $0x28] sm:$0xff]
    %v98 = vld [vmem:[%s5 + $0x30] sm:$0xff]
    %v99 = vld [vmem:[%s5 + $0x38] sm:$0xff]
    %vm100 = vcmask 261120
    %v102 = vsel %vm100, %v92, 0
    %v105 = vsel %vm100, %v93, 0
    %v108 = vsel %vm100, %v94, 0
    %v111 = vsel %vm100, %v95, 0
    %v114 = vsel %vm100, %v96, 0
    %v117 = vsel %vm100, %v97, 0
    %v120 = vsel %vm100, %v98, 0
    %v123 = vsel %vm100, %v99, 0
    %125 = vmatprep.subr.mxu0 0.0
    %126 = vmatpush1.msra.mxu0 0.0
    %127 = vmatprep.subr.mxu0 0.0
    %128 = vmatpush1.msra.mxu0 0.0
    %129 = vmatprep.subr.mxu0 0.0
    %130 = vmatpush1.msra.mxu0 0.0
    %131 = vmatprep.subr.mxu0 0.0
    %132 = vmatpush1.msra.mxu0 0.0
    %133 = vmatprep.subr.mxu0 0.0
    %134 = vmatpush1.msra.mxu0 0.0
    %135 = vmatprep.subr.mxu0 0.0
    %136 = vmatpush1.msra.mxu0 0.0
    %137 = vmatprep.subr.mxu0 0.0
    %138 = vmatpush1.msra.mxu0 0.0
    %139 = vmatprep.subr.mxu0 0.0
    %140 = vmatpush1.msra.mxu0 0.0
    %141 = vmatprep.subr.mxu0 0.0
    %142 = vmatpush1.msra.mxu0 0.0
    %143 = vmatprep.subr.mxu0 0.0
    %144 = vmatpush1.msra.mxu0 0.0
    %145 = vmatprep.subr.mxu0 0.0
    %146 = vmatpush1.msra.mxu0 0.0
    %147 = vmatprep.subr.mxu0 0.0
    %148 = vmatpush1.msra.mxu0 0.0
    %149 = vmatprep.subr.mxu0 0.0
    %150 = vmatpush1.msra.mxu0 %v91
    %151 = vmatprep.subr.mxu0 0.0
    %152 = vmatpush1.msra.mxu0 %v90
    %153 = vmatprep.subr.mxu0 0.0
    %154 = vmatpush1.msra.mxu0 %v89
    %155 = vmatprep.subr.mxu0 0.0
    %156 = vmatpush1.msra.mxu0 %v88
    %157 = vmatprep.subr.mxu0 0.0
    %158 = vmatpush2.msra.mxu0 0.0
    %159 = vmatprep.subr.mxu0 0.0
    %160 = vmatpush2.msra.mxu0 0.0
    %161 = vmatprep.subr.mxu0 0.0
    %162 = vmatpush2.msra.mxu0 0.0
    %163 = vmatprep.subr.mxu0 0.0
    %164 = vmatpush2.msra.mxu0 0.0
    %165 = vmatprep.subr.mxu0 0.0
    %166 = vmatpush2.msra.mxu0 0.0
    %167 = vmatprep.subr.mxu0 0.0
    %168 = vmatpush2.msra.mxu0 0.0
    %169 = vmatprep.subr.mxu0 0.0
    %170 = vmatpush2.msra.mxu0 0.0
    %171 = vmatprep.subr.mxu0 0.0
    %172 = vmatpush2.msra.mxu0 0.0
    %173 = vmatprep.subr.mxu0 0.0
    %174 = vmatpush2.msra.mxu0 0.0
    %175 = vmatprep.subr.mxu0 0.0
    %176 = vmatpush2.msra.mxu0 0.0
    %177 = vmatprep.subr.mxu0 0.0
    %178 = vmatpush2.msra.mxu0 0.0
    %179 = vmatprep.subr.mxu0 0.0
    %180 = vmatpush2.msra.mxu0 0.0
    %181 = vmatprep.subr.mxu0 0.0
    %182 = vmatpush2.msra.mxu0 0.0
    %183 = vmatprep.subr.mxu0 0.0
    %184 = vmatpush2.msra.mxu0 0.0
    %185 = vmatprep.subr.mxu0 0.0
    %186 = vmatpush2.msra.mxu0 0.0
    %187 = vmatprep.subr.mxu0 0.0
    %188 = vmatpush2.msra.mxu0 0.0
    %189 = vmatprep.mubr.f32.mxu0 0.0
    %190 = vmatmul.mubr.f32.gmra.mxu0 %v102
    %v191 = vpop.f32.mrf.mxu0
    %v192 = vadd.f32 0.0, %v191
    %v193 = vpop.f32.mrf.mxu0
    %194 = vmatprep.mubr.f32.mxu0 0.0
    %195 = vmatmul.mubr.f32.gmra.mxu0 %v105
    %v196 = vpop.f32.mrf.mxu0
    %v197 = vadd.f32 0.0, %v196
    %v198 = vpop.f32.mrf.mxu0
    %199 = vmatprep.mubr.f32.mxu0 0.0
    %200 = vmatmul.mubr.f32.gmra.mxu0 %v108
    %v201 = vpop.f32.mrf.mxu0
    %v202 = vadd.f32 0.0, %v201
    %v203 = vpop.f32.mrf.mxu0
    %204 = vmatprep.mubr.f32.mxu0 0.0
    %205 = vmatmul.mubr.f32.gmra.mxu0 %v111
    %v206 = vpop.f32.mrf.mxu0
    %v207 = vadd.f32 0.0, %v206
    %v208 = vpop.f32.mrf.mxu0
    %209 = vmatprep.mubr.f32.mxu0 0.0
    %210 = vmatmul.mubr.f32.gmra.mxu0 %v114
    %v211 = vpop.f32.mrf.mxu0
    %v212 = vadd.f32 0.0, %v211
    %v213 = vpop.f32.mrf.mxu0
    %214 = vmatprep.mubr.f32.mxu0 0.0
    %215 = vmatmul.mubr.f32.gmra.mxu0 %v117
    %v216 = vpop.f32.mrf.mxu0
    %v217 = vadd.f32 0.0, %v216
    %v218 = vpop.f32.mrf.mxu0
    %219 = vmatprep.mubr.f32.mxu0 0.0
    %220 = vmatmul.mubr.f32.gmra.mxu0 %v120
    %v221 = vpop.f32.mrf.mxu0
    %v222 = vadd.f32 0.0, %v221
    %v223 = vpop.f32.mrf.mxu0
    %224 = vmatprep.mubr.f32.mxu0 0.0
    %225 = vmatmul.mubr.f32.gmra.mxu0 %v123
    %v226 = vpop.f32.mrf.mxu0
    %v227 = vadd.f32 0.0, %v226
    %v228 = vpop.f32.mrf.mxu0
    %229 = vdwg.mxu0
    %v230 = vld [vmem:[#allocation2] sm:$0xff]
    %v231 = vld [vmem:[#allocation2 + $0x8] sm:$0xff]
    %v232 = vld [vmem:[#allocation2 + $0x10] sm:$0xff]
    %v233 = vld [vmem:[#allocation2 + $0x18] sm:$0xff]
    %v235 = vsel %vm100, %v230, 0
    %v238 = vsel %vm100, %v231, 0
    %v241 = vsel %vm100, %v232, 0
    %v244 = vsel %vm100, %v233, 0
    %246 = vmatprep.subr.mxu0 0.0
    %247 = vmatpush1.msra.mxu0 0.0
    %248 = vmatprep.subr.mxu0 0.0
    %249 = vmatpush1.msra.mxu0 0.0
    %250 = vmatprep.subr.mxu0 0.0
    %251 = vmatpush1.msra.mxu0 0.0
    %252 = vmatprep.subr.mxu0 0.0
    %253 = vmatpush1.msra.mxu0 0.0
    %254 = vmatprep.subr.mxu0 0.0
    %255 = vmatpush1.msra.mxu0 0.0
    %256 = vmatprep.subr.mxu0 0.0
    %257 = vmatpush1.msra.mxu0 0.0
    %258 = vmatprep.subr.mxu0 0.0
    %259 = vmatpush1.msra.mxu0 0.0
    %260 = vmatprep.subr.mxu0 0.0
    %261 = vmatpush1.msra.mxu0 0.0
    %262 = vmatprep.subr.mxu0 0.0
    %263 = vmatpush1.msra.mxu0 0.0
    %264 = vmatprep.subr.mxu0 0.0
    %265 = vmatpush1.msra.mxu0 0.0
    %266 = vmatprep.subr.mxu0 0.0
    %267 = vmatpush1.msra.mxu0 0.0
    %268 = vmatprep.subr.mxu0 0.0
    %269 = vmatpush1.msra.mxu0 0.0
    %270 = vmatprep.subr.mxu0 0.0
    %271 = vmatpush1.msra.mxu0 %v83
    %272 = vmatprep.subr.mxu0 0.0
    %273 = vmatpush1.msra.mxu0 %v82
    %274 = vmatprep.subr.mxu0 0.0
    %275 = vmatpush1.msra.mxu0 %v81
    %276 = vmatprep.subr.mxu0 0.0
    %277 = vmatpush1.msra.mxu0 %v80
    %278 = vmatprep.subr.mxu0 0.0
    %279 = vmatpush2.msra.mxu0 0.0
    %280 = vmatprep.subr.mxu0 0.0
    %281 = vmatpush2.msra.mxu0 0.0
    %282 = vmatprep.subr.mxu0 0.0
    %283 = vmatpush2.msra.mxu0 0.0
    %284 = vmatprep.subr.mxu0 0.0
    %285 = vmatpush2.msra.mxu0 0.0
    %286 = vmatprep.subr.mxu0 0.0
    %287 = vmatpush2.msra.mxu0 0.0
    %288 = vmatprep.subr.mxu0 0.0
    %289 = vmatpush2.msra.mxu0 0.0
    %290 = vmatprep.subr.mxu0 0.0
    %291 = vmatpush2.msra.mxu0 0.0
    %292 = vmatprep.subr.mxu0 0.0
    %293 = vmatpush2.msra.mxu0 0.0
    %294 = vmatprep.subr.mxu0 0.0
    %295 = vmatpush2.msra.mxu0 0.0
    %296 = vmatprep.subr.mxu0 0.0
    %297 = vmatpush2.msra.mxu0 0.0
    %298 = vmatprep.subr.mxu0 0.0
    %299 = vmatpush2.msra.mxu0 0.0
    %300 = vmatprep.subr.mxu0 0.0
    %301 = vmatpush2.msra.mxu0 0.0
    %302 = vmatprep.subr.mxu0 0.0
    %303 = vmatpush2.msra.mxu0 0.0
    %304 = vmatprep.subr.mxu0 0.0
    %305 = vmatpush2.msra.mxu0 0.0
    %306 = vmatprep.subr.mxu0 0.0
    %307 = vmatpush2.msra.mxu0 0.0
    %308 = vmatprep.subr.mxu0 0.0
    %309 = vmatpush2.msra.mxu0 0.0
    %310 = vmatprep.mubr.f32.mxu0 0.0
    %311 = vmatmul.mubr.f32.gmra.mxu0 %v235
    %v312 = vpop.f32.mrf.mxu0
    %v313 = vadd.f32 %v192, %v312
    %v314 = vpop.f32.mrf.mxu0
    %315 = vmatprep.mubr.f32.mxu0 0.0
    %316 = vmatmul.mubr.f32.gmra.mxu0 %v238
    %v317 = vpop.f32.mrf.mxu0
    %v318 = vadd.f32 %v197, %v317
    %v319 = vpop.f32.mrf.mxu0
    %320 = vmatprep.mubr.f32.mxu0 0.0
    %321 = vmatmul.mubr.f32.gmra.mxu0 %v241
    %v322 = vpop.f32.mrf.mxu0
    %v323 = vadd.f32 %v202, %v322
    %v324 = vpop.f32.mrf.mxu0
    %325 = vmatprep.mubr.f32.mxu0 0.0
    %326 = vmatmul.mubr.f32.gmra.mxu0 %v244
    %v327 = vpop.f32.mrf.mxu0
    %v328 = vadd.f32 %v207, %v327
    %v329 = vpop.f32.mrf.mxu0
    %330 = vdwg.mxu0
    %v331 = vld [vmem:[#allocation5] sm:$0xff]
    %v332 = vld [vmem:[#allocation5 + $0x8] sm:$0xff]
    %v333 = vld [vmem:[#allocation5 + $0x10] sm:$0xff]
    %v334 = vld [vmem:[#allocation5 + $0x18] sm:$0xff]
    %v336 = vsel %vm100, %v331, 0
    %v339 = vsel %vm100, %v332, 0
    %v342 = vsel %vm100, %v333, 0
    %v345 = vsel %vm100, %v334, 0
    %347 = vmatprep.subr.mxu0 0.0
    %348 = vmatpush1.msra.mxu0 0.0
    %349 = vmatprep.subr.mxu0 0.0
    %350 = vmatpush1.msra.mxu0 0.0
    %351 = vmatprep.subr.mxu0 0.0
    %352 = vmatpush1.msra.mxu0 0.0
    %353 = vmatprep.subr.mxu0 0.0
    %354 = vmatpush1.msra.mxu0 0.0
    %355 = vmatprep.subr.mxu0 0.0
    %356 = vmatpush1.msra.mxu0 0.0
    %357 = vmatprep.subr.mxu0 0.0
    %358 = vmatpush1.msra.mxu0 0.0
    %359 = vmatprep.subr.mxu0 0.0
    %360 = vmatpush1.msra.mxu0 0.0
    %361 = vmatprep.subr.mxu0 0.0
    %362 = vmatpush1.msra.mxu0 0.0
    %363 = vmatprep.subr.mxu0 0.0
    %364 = vmatpush1.msra.mxu0 0.0
    %365 = vmatprep.subr.mxu0 0.0
    %366 = vmatpush1.msra.mxu0 0.0
    %367 = vmatprep.subr.mxu0 0.0
    %368 = vmatpush1.msra.mxu0 0.0
    %369 = vmatprep.subr.mxu0 0.0
    %370 = vmatpush1.msra.mxu0 0.0
    %371 = vmatprep.subr.mxu0 0.0
    %372 = vmatpush1.msra.mxu0 %v87
    %373 = vmatprep.subr.mxu0 0.0
    %374 = vmatpush1.msra.mxu0 %v86
    %375 = vmatprep.subr.mxu0 0.0
    %376 = vmatpush1.msra.mxu0 %v85
    %377 = vmatprep.subr.mxu0 0.0
    %378 = vmatpush1.msra.mxu0 %v84
    %379 = vmatprep.subr.mxu0 0.0
    %380 = vmatpush2.msra.mxu0 0.0
    %381 = vmatprep.subr.mxu0 0.0
    %382 = vmatpush2.msra.mxu0 0.0
    %383 = vmatprep.subr.mxu0 0.0
    %384 = vmatpush2.msra.mxu0 0.0
    %385 = vmatprep.subr.mxu0 0.0
    %386 = vmatpush2.msra.mxu0 0.0
    %387 = vmatprep.subr.mxu0 0.0
    %388 = vmatpush2.msra.mxu0 0.0
    %389 = vmatprep.subr.mxu0 0.0
    %390 = vmatpush2.msra.mxu0 0.0
    %391 = vmatprep.subr.mxu0 0.0
    %392 = vmatpush2.msra.mxu0 0.0
    %393 = vmatprep.subr.mxu0 0.0
    %394 = vmatpush2.msra.mxu0 0.0
    %395 = vmatprep.subr.mxu0 0.0
    %396 = vmatpush2.msra.mxu0 0.0
    %397 = vmatprep.subr.mxu0 0.0
    %398 = vmatpush2.msra.mxu0 0.0
    %399 = vmatprep.subr.mxu0 0.0
    %400 = vmatpush2.msra.mxu0 0.0
    %401 = vmatprep.subr.mxu0 0.0
    %402 = vmatpush2.msra.mxu0 0.0
    %403 = vmatprep.subr.mxu0 0.0
    %404 = vmatpush2.msra.mxu0 0.0
    %405 = vmatprep.subr.mxu0 0.0
    %406 = vmatpush2.msra.mxu0 0.0
    %407 = vmatprep.subr.mxu0 0.0
    %408 = vmatpush2.msra.mxu0 0.0
    %409 = vmatprep.subr.mxu0 0.0
    %410 = vmatpush2.msra.mxu0 0.0
    %411 = vmatprep.mubr.f32.mxu0 0.0
    %412 = vmatmul.mubr.f32.gmra.mxu0 %v336
    %v413 = vpop.f32.mrf.mxu0
    %v414 = vadd.f32 %v212, %v413
    %v415 = vpop.f32.mrf.mxu0
    %416 = vmatprep.mubr.f32.mxu0 0.0
    %417 = vmatmul.mubr.f32.gmra.mxu0 %v339
    %v418 = vpop.f32.mrf.mxu0
    %v419 = vadd.f32 %v217, %v418
    %v420 = vpop.f32.mrf.mxu0
    %421 = vmatprep.mubr.f32.mxu0 0.0
    %422 = vmatmul.mubr.f32.gmra.mxu0 %v342
    %v423 = vpop.f32.mrf.mxu0
    %v424 = vadd.f32 %v222, %v423
    %v425 = vpop.f32.mrf.mxu0
    %426 = vmatprep.mubr.f32.mxu0 0.0
    %427 = vmatmul.mubr.f32.gmra.mxu0 %v345
    %v428 = vpop.f32.mrf.mxu0
    %v429 = vadd.f32 %v227, %v428
    %v430 = vpop.f32.mrf.mxu0
    %431 = vdwg.mxu0
    %v432 = vtanh.pop %v313
    %v433 = vtanh.pop %v318
    %v434 = vtanh.pop %v323
    %v435 = vtanh.pop %v328
    %v436 = vld [vmem:[%s7] sm:$0x1]
    %v438 = vsel %vm100, %v436, 0
    %440 = vmatprep.subr.mxu0 0.0
    %441 = vmatpush1.msra.mxu0 0.0
    %442 = vmatprep.subr.mxu0 0.0
    %443 = vmatpush1.msra.mxu0 0.0
    %444 = vmatprep.subr.mxu0 0.0
    %445 = vmatpush1.msra.mxu0 0.0
    %446 = vmatprep.subr.mxu0 0.0
    %447 = vmatpush1.msra.mxu0 0.0
    %448 = vmatprep.subr.mxu0 0.0
    %449 = vmatpush1.msra.mxu0 0.0
    %450 = vmatprep.subr.mxu0 0.0
    %451 = vmatpush1.msra.mxu0 0.0
    %452 = vmatprep.subr.mxu0 0.0
    %453 = vmatpush1.msra.mxu0 0.0
    %454 = vmatprep.subr.mxu0 0.0
    %455 = vmatpush1.msra.mxu0 0.0
    %456 = vmatprep.subr.mxu0 0.0
    %457 = vmatpush1.msra.mxu0 0.0
    %458 = vmatprep.subr.mxu0 0.0
    %459 = vmatpush1.msra.mxu0 0.0
    %460 = vmatprep.subr.mxu0 0.0
    %461 = vmatpush1.msra.mxu0 0.0
    %462 = vmatprep.subr.mxu0 0.0
    %463 = vmatpush1.msra.mxu0 0.0
    %464 = vmatprep.subr.mxu0 0.0
    %465 = vmatpush1.msra.mxu0 %v435
    %466 = vmatprep.subr.mxu0 0.0
    %467 = vmatpush1.msra.mxu0 %v434
    %468 = vmatprep.subr.mxu0 0.0
    %469 = vmatpush1.msra.mxu0 %v433
    %470 = vmatprep.subr.mxu0 0.0
    %471 = vmatpush1.msra.mxu0 %v432
    %472 = vmatprep.subr.mxu0 0.0
    %473 = vmatpush2.msra.mxu0 0.0
    %474 = vmatprep.subr.mxu0 0.0
    %475 = vmatpush2.msra.mxu0 0.0
    %476 = vmatprep.subr.mxu0 0.0
    %477 = vmatpush2.msra.mxu0 0.0
    %478 = vmatprep.subr.mxu0 0.0
    %479 = vmatpush2.msra.mxu0 0.0
    %480 = vmatprep.subr.mxu0 0.0
    %481 = vmatpush2.msra.mxu0 0.0
    %482 = vmatprep.subr.mxu0 0.0
    %483 = vmatpush2.msra.mxu0 0.0
    %484 = vmatprep.subr.mxu0 0.0
    %485 = vmatpush2.msra.mxu0 0.0
    %486 = vmatprep.subr.mxu0 0.0
    %487 = vmatpush2.msra.mxu0 0.0
    %488 = vmatprep.subr.mxu0 0.0
    %489 = vmatpush2.msra.mxu0 0.0
    %490 = vmatprep.subr.mxu0 0.0
    %491 = vmatpush2.msra.mxu0 0.0
    %492 = vmatprep.subr.mxu0 0.0
    %493 = vmatpush2.msra.mxu0 0.0
    %494 = vmatprep.subr.mxu0 0.0
    %495 = vmatpush2.msra.mxu0 0.0
    %496 = vmatprep.subr.mxu0 0.0
    %497 = vmatpush2.msra.mxu0 0.0
    %498 = vmatprep.subr.mxu0 0.0
    %499 = vmatpush2.msra.mxu0 0.0
    %500 = vmatprep.subr.mxu0 0.0
    %501 = vmatpush2.msra.mxu0 0.0
    %502 = vmatprep.subr.mxu0 0.0
    %503 = vmatpush2.msra.mxu0 0.0
    %504 = vmatprep.mubr.f32.mxu0 0.0
    %505 = vmatmul.mubr.f32.gmra.mxu0 %v438
    %v506 = vpop.f32.mrf.mxu0
    %v507 = vadd.f32 0.0, %v506
    %v508 = vpop.f32.mrf.mxu0
    %509 = vdwg.mxu0
    %v510 = vld [vmem:[%s9] sm:$0x3]
    %v511 = vld [vmem:[%s10] sm:$0xff]
    %v512 = vld [vmem:[%s10 + $0x8] sm:$0xff]
    %v513 = vld [vmem:[%s10 + $0x10] sm:$0xff]
    %v514 = vld [vmem:[%s10 + $0x18] sm:$0xff]
    %vm515 = vcmask 253952
    %v516 = vsel %vm515, %v507, -inf
    %517 = vmax.xlane.f32.xlu0 %v516
    %v518 = vpop.xlane.xlu0 %517
    %v519 = vsub.f32 %v507, %v518
    %v520 = vmul.f32 %v519, 1.442695
    %v521 = vpow.pop %v520
    %v523 = vsel %vm100, %v521, 0
    %525 = vmatprep.subr.mxu0 0.0
    %526 = vmatpush1.msra.mxu0 0.0
    %527 = vmatprep.subr.mxu0 0.0
    %528 = vmatpush1.msra.mxu0 0.0
    %529 = vmatprep.subr.mxu0 0.0
    %530 = vmatpush1.msra.mxu0 0.0
    %531 = vmatprep.subr.mxu0 0.0
    %532 = vmatpush1.msra.mxu0 0.0
    %533 = vmatprep.subr.mxu0 0.0
    %534 = vmatpush1.msra.mxu0 0.0
    %535 = vmatprep.subr.mxu0 0.0
    %536 = vmatpush1.msra.mxu0 0.0
    %537 = vmatprep.subr.mxu0 0.0
    %538 = vmatpush1.msra.mxu0 0.0
    %539 = vmatprep.subr.mxu0 0.0
    %540 = vmatpush1.msra.mxu0 0.0
    %541 = vmatprep.subr.mxu0 0.0
    %542 = vmatpush1.msra.mxu0 0.0
    %543 = vmatprep.subr.mxu0 0.0
    %544 = vmatpush1.msra.mxu0 0.0
    %545 = vmatprep.subr.mxu0 0.0
    %546 = vmatpush1.msra.mxu0 0.0
    %547 = vmatprep.subr.mxu0 0.0
    %548 = vmatpush1.msra.mxu0 0.0
    %549 = vmatprep.subr.mxu0 0.0
    %550 = vmatpush1.msra.mxu0 %v514
    %551 = vmatprep.subr.mxu0 0.0
    %552 = vmatpush1.msra.mxu0 %v513
    %553 = vmatprep.subr.mxu0 0.0
    %554 = vmatpush1.msra.mxu0 %v512
    %555 = vmatprep.subr.mxu0 0.0
    %556 = vmatpush1.msra.mxu0 %v511
    %557 = vmatprep.subr.mxu0 0.0
    %558 = vmatpush2.msra.mxu0 0.0
    %559 = vmatprep.subr.mxu0 0.0
    %560 = vmatpush2.msra.mxu0 0.0
    %561 = vmatprep.subr.mxu0 0.0
    %562 = vmatpush2.msra.mxu0 0.0
    %563 = vmatprep.subr.mxu0 0.0
    %564 = vmatpush2.msra.mxu0 0.0
    %565 = vmatprep.subr.mxu0 0.0
    %566 = vmatpush2.msra.mxu0 0.0
    %567 = vmatprep.subr.mxu0 0.0
    %568 = vmatpush2.msra.mxu0 0.0
    %569 = vmatprep.subr.mxu0 0.0
    %570 = vmatpush2.msra.mxu0 0.0
    %571 = vmatprep.subr.mxu0 0.0
    %572 = vmatpush2.msra.mxu0 0.0
    %573 = vmatprep.subr.mxu0 0.0
    %574 = vmatpush2.msra.mxu0 0.0
    %575 = vmatprep.subr.mxu0 0.0
    %576 = vmatpush2.msra.mxu0 0.0
    %577 = vmatprep.subr.mxu0 0.0
    %578 = vmatpush2.msra.mxu0 0.0
    %579 = vmatprep.subr.mxu0 0.0
    %580 = vmatpush2.msra.mxu0 0.0
    %581 = vmatprep.subr.mxu0 0.0
    %582 = vmatpush2.msra.mxu0 0.0
    %583 = vmatprep.subr.mxu0 0.0
    %584 = vmatpush2.msra.mxu0 0.0
    %585 = vmatprep.subr.mxu0 0.0
    %586 = vmatpush2.msra.mxu0 0.0
    %587 = vmatprep.subr.mxu0 0.0
    %588 = vmatpush2.msra.mxu0 0.0
    %589 = vmatprep.mubr.f32.mxu0 0.0
    %590 = vmatmul.mubr.f32.gmra.mxu0 %v523
    %v591 = vpop.f32.mrf.mxu0
    %v592 = vadd.f32 0.0, %v591
    %v593 = vpop.f32.mrf.mxu0
    %594 = vdwg.mxu0
    %v595 = vrcp.pop %v592
    %vm596 = vcmask 15360
    %v598 = vsel %vm596, %v595, 0
    %vm600 = vcmask 1041408
    %v602 = vsel %vm600, %v510, 0
    %604 = vmatprep.subr.mxu0 0.0
    %605 = vmatpush1.msra.mxu0 0.0
    %606 = vmatprep.subr.mxu0 0.0
    %607 = vmatpush1.msra.mxu0 0.0
    %608 = vmatprep.subr.mxu0 0.0
    %609 = vmatpush1.msra.mxu0 0.0
    %610 = vmatprep.subr.mxu0 0.0
    %611 = vmatpush1.msra.mxu0 0.0
    %612 = vmatprep.subr.mxu0 0.0
    %613 = vmatpush1.msra.mxu0 0.0
    %614 = vmatprep.subr.mxu0 0.0
    %615 = vmatpush1.msra.mxu0 0.0
    %616 = vmatprep.subr.mxu0 0.0
    %617 = vmatpush1.msra.mxu0 0.0
    %618 = vmatprep.subr.mxu0 0.0
    %619 = vmatpush1.msra.mxu0 0.0
    %620 = vmatprep.subr.mxu0 0.0
    %621 = vmatpush1.msra.mxu0 0.0
    %622 = vmatprep.subr.mxu0 0.0
    %623 = vmatpush1.msra.mxu0 0.0
    %624 = vmatprep.subr.mxu0 0.0
    %625 = vmatpush1.msra.mxu0 0.0
    %626 = vmatprep.subr.mxu0 0.0
    %627 = vmatpush1.msra.mxu0 0.0
    %628 = vmatprep.subr.mxu0 0.0
    %629 = vmatpush1.msra.mxu0 0.0
    %630 = vmatprep.subr.mxu0 0.0
    %631 = vmatpush1.msra.mxu0 0.0
    %632 = vmatprep.subr.mxu0 0.0
    %633 = vmatpush1.msra.mxu0 0.0
    %634 = vmatprep.subr.mxu0 0.0
    %635 = vmatpush1.msra.mxu0 %v602
    %636 = vmatprep.subr.mxu0 0.0
    %637 = vmatpush2.msra.mxu0 0.0
    %638 = vmatprep.subr.mxu0 0.0
    %639 = vmatpush2.msra.mxu0 0.0
    %640 = vmatprep.subr.mxu0 0.0
    %641 = vmatpush2.msra.mxu0 0.0
    %642 = vmatprep.subr.mxu0 0.0
    %643 = vmatpush2.msra.mxu0 0.0
    %644 = vmatprep.subr.mxu0 0.0
    %645 = vmatpush2.msra.mxu0 0.0
    %646 = vmatprep.subr.mxu0 0.0
    %647 = vmatpush2.msra.mxu0 0.0
    %648 = vmatprep.subr.mxu0 0.0
    %649 = vmatpush2.msra.mxu0 0.0
    %650 = vmatprep.subr.mxu0 0.0
    %651 = vmatpush2.msra.mxu0 0.0
    %652 = vmatprep.subr.mxu0 0.0
    %653 = vmatpush2.msra.mxu0 0.0
    %654 = vmatprep.subr.mxu0 0.0
    %655 = vmatpush2.msra.mxu0 0.0
    %656 = vmatprep.subr.mxu0 0.0
    %657 = vmatpush2.msra.mxu0 0.0
    %658 = vmatprep.subr.mxu0 0.0
    %659 = vmatpush2.msra.mxu0 0.0
    %660 = vmatprep.subr.mxu0 0.0
    %661 = vmatpush2.msra.mxu0 0.0
    %662 = vmatprep.subr.mxu0 0.0
    %663 = vmatpush2.msra.mxu0 0.0
    %664 = vmatprep.subr.mxu0 0.0
    %665 = vmatpush2.msra.mxu0 0.0
    %666 = vmatprep.subr.mxu0 0.0
    %667 = vmatpush2.msra.mxu0 0.0
    %668 = vmatprep.mubr.f32.mxu0 0.0
    %669 = vmatmul.mubr.f32.gmra.mxu0 %v598
    %v670 = vpop.f32.mrf.mxu0
    %v671 = vadd.f32 0.0, %v670
    %v672 = vpop.f32.mrf.mxu0
    %673 = vdwg.mxu0
    %v674 = vmul.f32 %v521, %v671
    %v675 = vlaneseq
    %v676 = vshrl.u32 %v675, 7
    %v677 = vsub.s32 0, %v676
    %v678 = vrot.slane %v674, %v677
    %v679 = vmul.f32 %v84, %v678
    %v680 = vmul.f32 %v85, %v678
    %v681 = vmul.f32 %v86, %v678
    %v682 = vmul.f32 %v87, %v678
    %v684 = vsel %vm100, %v679, 0
    %v687 = vsel %vm100, %v680, 0
    %v690 = vsel %vm100, %v681, 0
    %v693 = vsel %vm100, %v682, 0
    %695 = vmatprep.subr.mxu0 0.0
    %696 = vmatpush1.msra.mxu0 0.0
    %697 = vmatprep.subr.mxu0 0.0
    %698 = vmatpush1.msra.mxu0 0.0
    %699 = vmatprep.subr.mxu0 0.0
    %700 = vmatpush1.msra.mxu0 0.0
    %701 = vmatprep.subr.mxu0 0.0
    %702 = vmatpush1.msra.mxu0 0.0
    %703 = vmatprep.subr.mxu0 0.0
    %704 = vmatpush1.msra.mxu0 0.0
    %705 = vmatprep.subr.mxu0 0.0
    %706 = vmatpush1.msra.mxu0 0.0
    %707 = vmatprep.subr.mxu0 0.0
    %708 = vmatpush1.msra.mxu0 0.0
    %709 = vmatprep.subr.mxu0 0.0
    %710 = vmatpush1.msra.mxu0 0.0
    %711 = vmatprep.subr.mxu0 0.0
    %712 = vmatpush1.msra.mxu0 0.0
    %713 = vmatprep.subr.mxu0 0.0
    %714 = vmatpush1.msra.mxu0 0.0
    %715 = vmatprep.subr.mxu0 0.0
    %716 = vmatpush1.msra.mxu0 0.0
    %717 = vmatprep.subr.mxu0 0.0
    %718 = vmatpush1.msra.mxu0 0.0
    %719 = vmatprep.subr.mxu0 0.0
    %720 = vmatpush1.msra.mxu0 %v514
    %721 = vmatprep.subr.mxu0 0.0
    %722 = vmatpush1.msra.mxu0 %v513
    %723 = vmatprep.subr.mxu0 0.0
    %724 = vmatpush1.msra.mxu0 %v512
    %725 = vmatprep.subr.mxu0 0.0
    %726 = vmatpush1.msra.mxu0 %v511
    %727 = vmatprep.subr.mxu0 0.0
    %728 = vmatpush2.msra.mxu0 0.0
    %729 = vmatprep.subr.mxu0 0.0
    %730 = vmatpush2.msra.mxu0 0.0
    %731 = vmatprep.subr.mxu0 0.0
    %732 = vmatpush2.msra.mxu0 0.0
    %733 = vmatprep.subr.mxu0 0.0
    %734 = vmatpush2.msra.mxu0 0.0
    %735 = vmatprep.subr.mxu0 0.0
    %736 = vmatpush2.msra.mxu0 0.0
    %737 = vmatprep.subr.mxu0 0.0
    %738 = vmatpush2.msra.mxu0 0.0
    %739 = vmatprep.subr.mxu0 0.0
    %740 = vmatpush2.msra.mxu0 0.0
    %741 = vmatprep.subr.mxu0 0.0
    %742 = vmatpush2.msra.mxu0 0.0
    %743 = vmatprep.subr.mxu0 0.0
    %744 = vmatpush2.msra.mxu0 0.0
    %745 = vmatprep.subr.mxu0 0.0
    %746 = vmatpush2.msra.mxu0 0.0
    %747 = vmatprep.subr.mxu0 0.0
    %748 = vmatpush2.msra.mxu0 0.0
    %749 = vmatprep.subr.mxu0 0.0
    %750 = vmatpush2.msra.mxu0 0.0
    %751 = vmatprep.subr.mxu0 0.0
    %752 = vmatpush2.msra.mxu0 0.0
    %753 = vmatprep.subr.mxu0 0.0
    %754 = vmatpush2.msra.mxu0 0.0
    %755 = vmatprep.subr.mxu0 0.0
    %756 = vmatpush2.msra.mxu0 0.0
    %757 = vmatprep.subr.mxu0 0.0
    %758 = vmatpush2.msra.mxu0 0.0
    %759 = vmatprep.mubr.f32.mxu0 0.0
    %760 = vmatmul.mubr.f32.gmra.mxu0 %v684
    %v761 = vpop.f32.mrf.mxu0
    %v762 = vadd.f32 0.0, %v761
    %v763 = vpop.f32.mrf.mxu0
    %764 = vmatprep.mubr.f32.mxu0 0.0
    %765 = vmatmul.mubr.f32.gmra.mxu0 %v687
    %v766 = vpop.f32.mrf.mxu0
    %v767 = vadd.f32 0.0, %v766
    %v768 = vpop.f32.mrf.mxu0
    %769 = vmatprep.mubr.f32.mxu0 0.0
    %770 = vmatmul.mubr.f32.gmra.mxu0 %v690
    %v771 = vpop.f32.mrf.mxu0
    %v772 = vadd.f32 0.0, %v771
    %v773 = vpop.f32.mrf.mxu0
    %774 = vmatprep.mubr.f32.mxu0 0.0
    %775 = vmatmul.mubr.f32.gmra.mxu0 %v693
    %v776 = vpop.f32.mrf.mxu0
    %v777 = vadd.f32 0.0, %v776
    %v778 = vpop.f32.mrf.mxu0
    %779 = vdwg.mxu0
    %v780 = vld [vmem:[#allocation7] sm:$0xff]
    %v781 = vld [vmem:[#allocation7 + $0x8] sm:$0xff]
    %v782 = vld [vmem:[#allocation7 + $0x10] sm:$0xff]
    %v783 = vld [vmem:[#allocation7 + $0x18] sm:$0xff]
    %v785 = vsel %vm100, %v780, 0
    %v788 = vsel %vm100, %v781, 0
    %v791 = vsel %vm100, %v782, 0
    %v794 = vsel %vm100, %v783, 0
    %796 = vmatprep.subr.mxu0 0.0
    %797 = vmatpush1.msra.mxu0 0.0
    %798 = vmatprep.subr.mxu0 0.0
    %799 = vmatpush1.msra.mxu0 0.0
    %800 = vmatprep.subr.mxu0 0.0
    %801 = vmatpush1.msra.mxu0 0.0
    %802 = vmatprep.subr.mxu0 0.0
    %803 = vmatpush1.msra.mxu0 0.0
    %804 = vmatprep.subr.mxu0 0.0
    %805 = vmatpush1.msra.mxu0 0.0
    %806 = vmatprep.subr.mxu0 0.0
    %807 = vmatpush1.msra.mxu0 0.0
    %808 = vmatprep.subr.mxu0 0.0
    %809 = vmatpush1.msra.mxu0 0.0
    %810 = vmatprep.subr.mxu0 0.0
    %811 = vmatpush1.msra.mxu0 0.0
    %812 = vmatprep.subr.mxu0 0.0
    %813 = vmatpush1.msra.mxu0 0.0
    %814 = vmatprep.subr.mxu0 0.0
    %815 = vmatpush1.msra.mxu0 0.0
    %816 = vmatprep.subr.mxu0 0.0
    %817 = vmatpush1.msra.mxu0 0.0
    %818 = vmatprep.subr.mxu0 0.0
    %819 = vmatpush1.msra.mxu0 0.0
    %820 = vmatprep.subr.mxu0 0.0
    %821 = vmatpush1.msra.mxu0 %v777
    %822 = vmatprep.subr.mxu0 0.0
    %823 = vmatpush1.msra.mxu0 %v772
    %824 = vmatprep.subr.mxu0 0.0
    %825 = vmatpush1.msra.mxu0 %v767
    %826 = vmatprep.subr.mxu0 0.0
    %827 = vmatpush1.msra.mxu0 %v762
    %828 = vmatprep.subr.mxu0 0.0
    %829 = vmatpush2.msra.mxu0 0.0
    %830 = vmatprep.subr.mxu0 0.0
    %831 = vmatpush2.msra.mxu0 0.0
    %832 = vmatprep.subr.mxu0 0.0
    %833 = vmatpush2.msra.mxu0 0.0
    %834 = vmatprep.subr.mxu0 0.0
    %835 = vmatpush2.msra.mxu0 0.0
    %836 = vmatprep.subr.mxu0 0.0
    %837 = vmatpush2.msra.mxu0 0.0
    %838 = vmatprep.subr.mxu0 0.0
    %839 = vmatpush2.msra.mxu0 0.0
    %840 = vmatprep.subr.mxu0 0.0
    %841 = vmatpush2.msra.mxu0 0.0
    %842 = vmatprep.subr.mxu0 0.0
    %843 = vmatpush2.msra.mxu0 0.0
    %844 = vmatprep.subr.mxu0 0.0
    %845 = vmatpush2.msra.mxu0 0.0
    %846 = vmatprep.subr.mxu0 0.0
    %847 = vmatpush2.msra.mxu0 0.0
    %848 = vmatprep.subr.mxu0 0.0
    %849 = vmatpush2.msra.mxu0 0.0
    %850 = vmatprep.subr.mxu0 0.0
    %851 = vmatpush2.msra.mxu0 0.0
    %852 = vmatprep.subr.mxu0 0.0
    %853 = vmatpush2.msra.mxu0 0.0
    %854 = vmatprep.subr.mxu0 0.0
    %855 = vmatpush2.msra.mxu0 0.0
    %856 = vmatprep.subr.mxu0 0.0
    %857 = vmatpush2.msra.mxu0 0.0
    %858 = vmatprep.subr.mxu0 0.0
    %859 = vmatpush2.msra.mxu0 0.0
    %860 = vmatprep.mubr.f32.mxu0 0.0
    %861 = vmatmul.mubr.f32.gmra.mxu0 %v785
    %v862 = vpop.f32.mrf.mxu0
    %v863 = vadd.f32 0.0, %v862
    %v864 = vpop.f32.mrf.mxu0
    %865 = vmatprep.mubr.f32.mxu0 0.0
    %866 = vmatmul.mubr.f32.gmra.mxu0 %v788
    %v867 = vpop.f32.mrf.mxu0
    %v868 = vadd.f32 0.0, %v867
    %v869 = vpop.f32.mrf.mxu0
    %870 = vmatprep.mubr.f32.mxu0 0.0
    %871 = vmatmul.mubr.f32.gmra.mxu0 %v791
    %v872 = vpop.f32.mrf.mxu0
    %v873 = vadd.f32 0.0, %v872
    %v874 = vpop.f32.mrf.mxu0
    %875 = vmatprep.mubr.f32.mxu0 0.0
    %876 = vmatmul.mubr.f32.gmra.mxu0 %v794
    %v877 = vpop.f32.mrf.mxu0
    %v878 = vadd.f32 0.0, %v877
    %v879 = vpop.f32.mrf.mxu0
    %880 = vdwg.mxu0
    %v882 = vsel %vm596, %v863, 0
    %v885 = vsel %vm596, %v868, 0
    %v888 = vsel %vm596, %v873, 0
    %v891 = vsel %vm596, %v878, 0
    %893 = vmatprep.subr.mxu0 0.0
    %894 = vmatpush1.msra.mxu0 0.0
    %895 = vmatprep.subr.mxu0 0.0
    %896 = vmatpush1.msra.mxu0 0.0
    %897 = vmatprep.subr.mxu0 0.0
    %898 = vmatpush1.msra.mxu0 0.0
    %899 = vmatprep.subr.mxu0 0.0
    %900 = vmatpush1.msra.mxu0 0.0
    %901 = vmatprep.subr.mxu0 0.0
    %902 = vmatpush1.msra.mxu0 0.0
    %903 = vmatprep.subr.mxu0 0.0
    %904 = vmatpush1.msra.mxu0 0.0
    %905 = vmatprep.subr.mxu0 0.0
    %906 = vmatpush1.msra.mxu0 0.0
    %907 = vmatprep.subr.mxu0 0.0
    %908 = vmatpush1.msra.mxu0 0.0
    %909 = vmatprep.subr.mxu0 0.0
    %910 = vmatpush1.msra.mxu0 0.0
    %911 = vmatprep.subr.mxu0 0.0
    %912 = vmatpush1.msra.mxu0 0.0
    %913 = vmatprep.subr.mxu0 0.0
    %914 = vmatpush1.msra.mxu0 0.0
    %915 = vmatprep.subr.mxu0 0.0
    %916 = vmatpush1.msra.mxu0 0.0
    %917 = vmatprep.subr.mxu0 0.0
    %918 = vmatpush1.msra.mxu0 0.0
    %919 = vmatprep.subr.mxu0 0.0
    %920 = vmatpush1.msra.mxu0 0.0
    %921 = vmatprep.subr.mxu0 0.0
    %922 = vmatpush1.msra.mxu0 0.0
    %923 = vmatprep.subr.mxu0 0.0
    %924 = vmatpush1.msra.mxu0 %v602
    %925 = vmatprep.subr.mxu0 0.0
    %926 = vmatpush2.msra.mxu0 0.0
    %927 = vmatprep.subr.mxu0 0.0
    %928 = vmatpush2.msra.mxu0 0.0
    %929 = vmatprep.subr.mxu0 0.0
    %930 = vmatpush2.msra.mxu0 0.0
    %931 = vmatprep.subr.mxu0 0.0
    %932 = vmatpush2.msra.mxu0 0.0
    %933 = vmatprep.subr.mxu0 0.0
    %934 = vmatpush2.msra.mxu0 0.0
    %935 = vmatprep.subr.mxu0 0.0
    %936 = vmatpush2.msra.mxu0 0.0
    %937 = vmatprep.subr.mxu0 0.0
    %938 = vmatpush2.msra.mxu0 0.0
    %939 = vmatprep.subr.mxu0 0.0
    %940 = vmatpush2.msra.mxu0 0.0
    %941 = vmatprep.subr.mxu0 0.0
    %942 = vmatpush2.msra.mxu0 0.0
    %943 = vmatprep.subr.mxu0 0.0
    %944 = vmatpush2.msra.mxu0 0.0
    %945 = vmatprep.subr.mxu0 0.0
    %946 = vmatpush2.msra.mxu0 0.0
    %947 = vmatprep.subr.mxu0 0.0
    %948 = vmatpush2.msra.mxu0 0.0
    %949 = vmatprep.subr.mxu0 0.0
    %950 = vmatpush2.msra.mxu0 0.0
    %951 = vmatprep.subr.mxu0 0.0
    %952 = vmatpush2.msra.mxu0 0.0
    %953 = vmatprep.subr.mxu0 0.0
    %954 = vmatpush2.msra.mxu0 0.0
    %955 = vmatprep.subr.mxu0 0.0
    %956 = vmatpush2.msra.mxu0 0.0
    %957 = vmatprep.mubr.f32.mxu0 0.0
    %958 = vmatmul.mubr.f32.gmra.mxu0 %v882
    %v959 = vpop.f32.mrf.mxu0
    %v960 = vadd.f32 0.0, %v959
    %v961 = vpop.f32.mrf.mxu0
    %962 = vmatprep.mubr.f32.mxu0 0.0
    %963 = vmatmul.mubr.f32.gmra.mxu0 %v885
    %v964 = vpop.f32.mrf.mxu0
    %v965 = vadd.f32 0.0, %v964
    %v966 = vpop.f32.mrf.mxu0
    %967 = vmatprep.mubr.f32.mxu0 0.0
    %968 = vmatmul.mubr.f32.gmra.mxu0 %v888
    %v969 = vpop.f32.mrf.mxu0
    %v970 = vadd.f32 0.0, %v969
    %v971 = vpop.f32.mrf.mxu0
    %972 = vmatprep.mubr.f32.mxu0 0.0
    %973 = vmatmul.mubr.f32.gmra.mxu0 %v891
    %v974 = vpop.f32.mrf.mxu0
    %v975 = vadd.f32 0.0, %v974
    %v976 = vpop.f32.mrf.mxu0
    %977 = vdwg.mxu0
    %v978 = vadd.f32 %v414, %v960
    %v979 = vadd.f32 %v419, %v965
    %v980 = vadd.f32 %v424, %v970
    %v981 = vadd.f32 %v429, %v975
    %v982 = vtanh.pop %v978
    %v983 = vtanh.pop %v979
    %v984 = vtanh.pop %v980
    %v985 = vtanh.pop %v981
    %v986 = vld [vmem:[%s8] sm:$0x1]
    %v988 = vsel %vm100, %v986, 0
    %990 = vmatprep.subr.mxu0 0.0
    %991 = vmatpush1.msra.mxu0 0.0
    %992 = vmatprep.subr.mxu0 0.0
    %993 = vmatpush1.msra.mxu0 0.0
    %994 = vmatprep.subr.mxu0 0.0
    %995 = vmatpush1.msra.mxu0 0.0
    %996 = vmatprep.subr.mxu0 0.0
    %997 = vmatpush1.msra.mxu0 0.0
    %998 = vmatprep.subr.mxu0 0.0
    %999 = vmatpush1.msra.mxu0 0.0
    %1000 = vmatprep.subr.mxu0 0.0
    %1001 = vmatpush1.msra.mxu0 0.0
    %1002 = vmatprep.subr.mxu0 0.0
    %1003 = vmatpush1.msra.mxu0 0.0
    %1004 = vmatprep.subr.mxu0 0.0
    %1005 = vmatpush1.msra.mxu0 0.0
    %1006 = vmatprep.subr.mxu0 0.0
    %1007 = vmatpush1.msra.mxu0 0.0
    %1008 = vmatprep.subr.mxu0 0.0
    %1009 = vmatpush1.msra.mxu0 0.0
    %1010 = vmatprep.subr.mxu0 0.0
    %1011 = vmatpush1.msra.mxu0 0.0
    %1012 = vmatprep.subr.mxu0 0.0
    %1013 = vmatpush1.msra.mxu0 0.0
    %1014 = vmatprep.subr.mxu0 0.0
    %1015 = vmatpush1.msra.mxu0 %v985
    %1016 = vmatprep.subr.mxu0 0.0
    %1017 = vmatpush1.msra.mxu0 %v984
    %1018 = vmatprep.subr.mxu0 0.0
    %1019 = vmatpush1.msra.mxu0 %v983
    %1020 = vmatprep.subr.mxu0 0.0
    %1021 = vmatpush1.msra.mxu0 %v982
    %1022 = vmatprep.subr.mxu0 0.0
    %1023 = vmatpush2.msra.mxu0 0.0
    %1024 = vmatprep.subr.mxu0 0.0
    %1025 = vmatpush2.msra.mxu0 0.0
    %1026 = vmatprep.subr.mxu0 0.0
    %1027 = vmatpush2.msra.mxu0 0.0
    %1028 = vmatprep.subr.mxu0 0.0
    %1029 = vmatpush2.msra.mxu0 0.0
    %1030 = vmatprep.subr.mxu0 0.0
    %1031 = vmatpush2.msra.mxu0 0.0
    %1032 = vmatprep.subr.mxu0 0.0
    %1033 = vmatpush2.msra.mxu0 0.0
    %1034 = vmatprep.subr.mxu0 0.0
    %1035 = vmatpush2.msra.mxu0 0.0
    %1036 = vmatprep.subr.mxu0 0.0
    %1037 = vmatpush2.msra.mxu0 0.0
    %1038 = vmatprep.subr.mxu0 0.0
    %1039 = vmatpush2.msra.mxu0 0.0
    %1040 = vmatprep.subr.mxu0 0.0
    %1041 = vmatpush2.msra.mxu0 0.0
    %1042 = vmatprep.subr.mxu0 0.0
    %1043 = vmatpush2.msra.mxu0 0.0
    %1044 = vmatprep.subr.mxu0 0.0
    %1045 = vmatpush2.msra.mxu0 0.0
    %1046 = vmatprep.subr.mxu0 0.0
    %1047 = vmatpush2.msra.mxu0 0.0
    %1048 = vmatprep.subr.mxu0 0.0
    %1049 = vmatpush2.msra.mxu0 0.0
    %1050 = vmatprep.subr.mxu0 0.0
    %1051 = vmatpush2.msra.mxu0 0.0
    %1052 = vmatprep.subr.mxu0 0.0
    %1053 = vmatpush2.msra.mxu0 0.0
    %1054 = vmatprep.mubr.f32.mxu0 0.0
    %1055 = vmatmul.mubr.f32.gmra.mxu0 %v988
    %v1056 = vpop.f32.mrf.mxu0
    %v1057 = vadd.f32 0.0, %v1056
    %v1058 = vpop.f32.mrf.mxu0
    %1059 = vdwg.mxu0
    %1060 = vst.msk [vmem:[#allocation8] sm:$0x1] %vm515, %v1057
    // Predicated region
    $region58: #{tpu_custom_call.1} parent=1 // pred_check
      _
    $region59: #{tpu_custom_call.1} parent=1 // pred_check_branch
      %1062 = sbr.rel (0) target = $region61
    $region60: #{tpu_custom_call.1} parent=1 // pred_region
      %s1064 = ssub.s32 16, 16
      %1065 = vsyncadd [#allocation4], %s1064
      %s1067 = sshll.u32 [#allocation8], 4
      %s1068 = int_to_ptr.vmem [resolvable:$true] %s1067
      %1070 = dma.vmem_to_hbm [thread:$0]  %s1068, 16, %s11, [#allocation4]
    $region61: #{tpu_custom_call.1} parent=1 // pred_fallthru
      _
    // Predicated region
    $region62: #{tpu_custom_call.1} parent=1 // pred_check
      _
    $region63: #{tpu_custom_call.1} parent=1 // pred_check_branch
      %1072 = sbr.rel (0) target = $region65
    $region64: #{tpu_custom_call.1} parent=1 // pred_region
      %1073 = dma.done [#allocation4], 16
    $region65: #{tpu_custom_call.1} parent=1 // pred_fallthru
      _
    %1074 = vsyncpa [#allocation3], 1
    %1075 = vsyncpa [#allocation6], 1
    %1076 = vsyncpa [#allocation4], 1

</llo_original>
